<compile_context>
chip_gen: v5e
topology: v5e:2x2
jax: 0.10.0
libtpu: 0.0.40
codegen_flags: <defaults>
</compile_context>

<pallas_src>
import jax
import jax.numpy as jnp
from jax.experimental import pallas as pl
from jax.experimental.pallas import tpu as pltpu

IN_DIM, H1, H2, OUT_DIM = 48, 40, 32, 27

# Double-buffered (in + out) tiles at this size are ~19.7 MiB: safe under the
# 32 MiB scoped-VMEM default on every generation, including v7x (64 MiB phys).
MAX_TILE_B = 32768


def _round_up(n, m):
    return ((n + m - 1) // m) * m


def handmodel_kernel(x_ref, w_ref, b_ref, o_ref):
    # Fused single-layer form: o = x @ W_fused + b_fused.
    x = x_ref[...].astype(jnp.float32)  # matches `input.to(torch.float32)`
    o_ref[...] = (
        jnp.dot(x, w_ref[...], preferred_element_type=jnp.float32) + b_ref[...]
    )


def hand_model_forward(x, params):
    """x: (B, 48) float32 (or bf16 — cast to f32 in-kernel). Returns (B, 27) f32."""
    w1, b1, w2, b2, w3, b3 = params

    # Algebraic layer fusion (exact up to f32 rounding order): 3 matmuls -> 1.
    w_fused = (w1 @ w2) @ w3                  # (48, 27)
    b_fused = (b1 @ w2 + b2) @ w3 + b3        # (1, 27)

    B = x.shape[0]
    # Tile the batch; keep sublane dim a multiple of 8, cap for v7x VMEM.
    tile_b = min(MAX_TILE_B, _round_up(max(B, 1), 8))
    b_pad = _round_up(B, tile_b)
    if b_pad != B:
        x = jnp.pad(x, ((0, b_pad - B), (0, 0)))

    grid = (b_pad // tile_b,)

    cost = pl.CostEstimate(
        flops=2 * b_pad * IN_DIM * OUT_DIM,
        transcendentals=0,
        bytes_accessed=(
            b_pad * IN_DIM * x.dtype.itemsize          # read x
            + b_pad * OUT_DIM * 4                      # write out
            + (w_fused.size + b_fused.size) * 4        # weights (VMEM-resident)
        ),
    )

    out = pl.pallas_call(
        handmodel_kernel,
        out_shape=jax.ShapeDtypeStruct((b_pad, OUT_DIM), jnp.float32),
        grid=grid,
        in_specs=[
            pl.BlockSpec((tile_b, IN_DIM), lambda i: (i, 0)),      # x: streamed
            pl.BlockSpec((IN_DIM, OUT_DIM), lambda i: (0, 0)),     # W_fused: resident
            pl.BlockSpec((1, OUT_DIM), lambda i: (0, 0)),          # b_fused: resident
        ],
        out_specs=pl.BlockSpec((tile_b, OUT_DIM), lambda i: (i, 0)),
        compiler_params=pltpu.CompilerParams(
            dimension_semantics=("parallel",),   # lets v7x shard batch across 2 TCs
        ),
        cost_estimate=cost,
    )(x, w_fused, b_fused)

    return out[:B]


def init_params(key):
    """Deterministic init mimicking nn.Linear default: U(-1/sqrt(fan_in), +1/sqrt(fan_in)).
    Weights stored as (in, out), i.e. transposed vs. PyTorch's (out, in)."""
    ks = jax.random.split(key, 6)

    def linear(kw, kb, fan_in, fan_out):
        bound = 1.0 / jnp.sqrt(jnp.float32(fan_in))
        w = jax.random.uniform(kw, (fan_in, fan_out), jnp.float32, -bound, bound)
        b = jax.random.uniform(kb, (1, fan_out), jnp.float32, -bound, bound)
        return w, b

    w1, b1 = linear(ks[0], ks[1], IN_DIM, H1)
    w2, b2 = linear(ks[2], ks[3], H1, H2)
    w3, b3 = linear(ks[4], ks[5], H2, OUT_DIM)
    return (w1, b1, w2, b2, w3, b3)


def reference_forward(x, params):
    """Un-fused reference matching the PyTorch forward exactly (layer by layer)."""
    w1, b1, w2, b2, w3, b3 = params
    h = x.astype(jnp.float32)
    h = h @ w1 + b1
    h = h @ w2 + b2
    return h @ w3 + b3


if __name__ == "__main__":
    key = jax.random.PRNGKey(0)
    k_param, k_x1, k_x2 = jax.random.split(key, 3)
    params = init_params(k_param)

    # Small shapes; second case exercises the ragged-batch padding path.
    ok = True
    for bsz, kx in ((8, k_x1), (5, k_x2)):
        x = jax.random.normal(kx, (bsz, IN_DIM), jnp.float32)
        out = jax.block_until_ready(hand_model_forward(x, params))
        ref = reference_forward(x, params)
        ok &= out.shape == (bsz, OUT_DIM)
        ok &= bool(jnp.allclose(out, ref, atol=1e-4, rtol=1e-4))

    assert ok, "mismatch vs. reference"
    print("KERNEL_OK")
</pallas_src>

<mosaic_0001>
module attributes {stable_mosaic.version = 11 : i64} {
  func.func @handmodel_kernel(%arg0: i32, %arg1: memref<8x48xf32, #tpu.memory_space<vmem>>, %arg2: memref<48x27xf32, #tpu.memory_space<vmem>>, %arg3: memref<1x27xf32, #tpu.memory_space<vmem>>, %arg4: memref<8x27xf32, #tpu.memory_space<vmem>>) attributes {dimension_semantics = [#tpu.dimension_semantics<parallel>], iteration_bounds = array<i64: 1>, scalar_prefetch = 0 : i64, scratch_operands = 0 : i64, tpu.core_type = #tpu.core_type<tc>, window_params = [{transform_indices = @transform_0, window_bounds = array<i64: 8, 48>}, {pipeline_mode = #tpu.pipeline_mode<synchronous>, transform_indices = @transform_1, window_bounds = array<i64: 48, 27>}, {pipeline_mode = #tpu.pipeline_mode<synchronous>, transform_indices = @transform_2, window_bounds = array<i64: 1, 27>}, {transform_indices = @transform_3, window_bounds = array<i64: 8, 27>}]} {
    %c0 = arith.constant 0 : index
    %c0_0 = arith.constant 0 : index
    %0 = vector.load %arg1[%c0, %c0_0] : memref<8x48xf32, #tpu.memory_space<vmem>>, vector<8x48xf32>
    %c0_1 = arith.constant 0 : index
    %c0_2 = arith.constant 0 : index
    %1 = vector.load %arg2[%c0_1, %c0_2] : memref<48x27xf32, #tpu.memory_space<vmem>>, vector<48x27xf32>
    %cst = arith.constant dense<0.000000e+00> : vector<8x27xf32>
    %2 = tpu.matmul %0, %1, %cst {dimension_numbers = #tpu.dot_dimension_numbers<[1], [0], [0], [1], [0, 0, 1, 1], [], []>} : vector<8x48xf32>, vector<48x27xf32>, vector<8x27xf32> -> vector<8x27xf32>
    %c0_3 = arith.constant 0 : index
    %c0_4 = arith.constant 0 : index
    %3 = vector.load %arg3[%c0_3, %c0_4] : memref<1x27xf32, #tpu.memory_space<vmem>>, vector<1x27xf32>
    %4 = vector.broadcast %3 : vector<1x27xf32> to vector<8x27xf32>
    %5 = arith.addf %2, %4 : vector<8x27xf32>
    %c0_5 = arith.constant 0 : index
    %c0_6 = arith.constant 0 : index
    %6 = vector.load %arg4[%c0_5, %c0_6] : memref<8x27xf32, #tpu.memory_space<vmem>>, vector<8x27xf32>
    tpu.vector_store %arg4[%c0_5, %c0_6], %5 {strides = array<i32>} : memref<8x27xf32, #tpu.memory_space<vmem>>, vector<8x27xf32>,
    return
  }
  func.func @transform_0(%arg0: i32) -> (i32, i32) {
    %c0_i32 = arith.constant 0 : i32
    %c0_i32_0 = arith.constant 0 : i32
    return %arg0, %c0_i32 : i32, i32
  }
  func.func @transform_1(%arg0: i32) -> (i32, i32) {
    %c0_i32 = arith.constant 0 : i32
    %c0_i32_0 = arith.constant 0 : i32
    %c0_i32_1 = arith.constant 0 : i32
    return %c0_i32, %c0_i32_0 : i32, i32
  }
  func.func @transform_2(%arg0: i32) -> (i32, i32) {
    %c0_i32 = arith.constant 0 : i32
    %c0_i32_0 = arith.constant 0 : i32
    %c0_i32_1 = arith.constant 0 : i32
    return %c0_i32, %c0_i32_0 : i32, i32
  }
  func.func @transform_3(%arg0: i32) -> (i32, i32) {
    %c0_i32 = arith.constant 0 : i32
    %c0_i32_0 = arith.constant 0 : i32
    return %arg0, %c0_i32 : i32, i32
  }
}

</mosaic_0001>

<llo_original>
// kernel: tpu_custom_call.1
$region0: #{tpu_custom_call.1}
  #allocation0 [shape = 'u32[]', space=smem, size = 0x4, offset = 0x4, fixed_abs, tag = 'smem constant byte address 0x4 - core index']
  #allocation1 [shape = 'u32[72,128]{1,0:T(1,128)}', space=vmem, size = 0x9000, scoped, tag = 'internal scratch']
  %s0 = inlined_call_operand.vmem [shape: f32[8,48], index: 0, kind: input, shape index: {}]
  %s1 = inlined_call_operand.vmem [shape: f32[48,27], index: 1, kind: input, shape index: {}]
  %s2 = inlined_call_operand.vmem [shape: f32[1,27], index: 2, kind: input, shape index: {}]
  %s3 = inlined_call_operand.hbm [shape: f32[8,27], index: 3, kind: output, shape index: {}]
  %s4 = sld [smem:[#allocation0]]
  $region22: #{tpu_custom_call.1} parent=0
    _
  %s6 = ssub.s32 1, %s4
  %s7 = scalar_select 0, %s6, %s4
  $region1: #{tpu_custom_call.1} parent=0
    #allocation2 [shape = 'u8[4096]{0}', space=vmem, size = 0x1000, scoped, tag = 'output window, operand 0, single buffered']
    #allocation3 [shape = 's32[1]{0}', space=sflag, size = 0x4, scoped, tag = 'scoped memory for tpu_custom_call.1']
    %8 = vsyncpa [#allocation3], 0
    // Predicated region
    $region2: #{tpu_custom_call.1} parent=1 // pred_check
      _
    $region3: #{tpu_custom_call.1} parent=1 // pred_check_branch
      %10 = sbr.rel (0) target = $region5
    $region4: #{tpu_custom_call.1} parent=1 // pred_region
      _
    $region5: #{tpu_custom_call.1} parent=1 // pred_fallthru
      _
    // Predicated region
    $region6: #{tpu_custom_call.1} parent=1 // pred_check
      _
    $region7: #{tpu_custom_call.1} parent=1 // pred_check_branch
      %12 = sbr.rel (0) target = $region9
    $region8: #{tpu_custom_call.1} parent=1 // pred_region
      _
    $region9: #{tpu_custom_call.1} parent=1 // pred_fallthru
      _
    // Predicated region
    $region10: #{tpu_custom_call.1} parent=1 // pred_check
      _
    $region11: #{tpu_custom_call.1} parent=1 // pred_check_branch
      %14 = sbr.rel (0) target = $region13
    $region12: #{tpu_custom_call.1} parent=1 // pred_region
      _
    $region13: #{tpu_custom_call.1} parent=1 // pred_fallthru
      _
    %v15 = vld [vmem:[%s0] sm:$0xff]
    %v16 = vld [vmem:[%s1] sm:$0xff]
    %v17 = vld [vmem:[%s1 + $0x8] sm:$0xff]
    %v18 = vld [vmem:[%s1 + $0x10] sm:$0xff]
    %v19 = vld [vmem:[%s1 + $0x18] sm:$0xff]
    %v20 = vld [vmem:[%s1 + $0x20] sm:$0xff]
    %v21 = vld [vmem:[%s1 + $0x28] sm:$0xff]
    %v22 = vld [vmem:[%s2] sm:$0x1]
    %v24 = vperm.slane %v22, 0
    %vm26 = vcmask 392192
    %v28 = vsel %vm26, %v15, 0
    %30 = vmatpush.msra.mxu0 0.0
    %31 = vmatpush.msra.mxu0 0.0
    %32 = vmatpush.msra.mxu0 0.0
    %33 = vmatpush.msra.mxu0 0.0
    %34 = vmatpush.msra.mxu0 0.0
    %35 = vmatpush.msra.mxu0 0.0
    %36 = vmatpush.msra.mxu0 0.0
    %37 = vmatpush.msra.mxu0 0.0
    %38 = vmatpush.msra.mxu0 0.0
    %39 = vmatpush.msra.mxu0 0.0
    %40 = vmatpush.msra.mxu0 %v21
    %41 = vmatpush.msra.mxu0 %v20
    %42 = vmatpush.msra.mxu0 %v19
    %43 = vmatpush.msra.mxu0 %v18
    %44 = vmatpush.msra.mxu0 %v17
    %45 = vmatpush.msra.mxu0 %v16
    %46 = vmatmul.f32.gmra.mxu0 %v28
    %v47 = vpop.f32.mrf.mxu0
    %v48 = vadd.f32 %v24, %v47
    %49 = vdwg.mxu0
    %vm50 = vcmask 220160
    %51 = vst.msk [vmem:[#allocation2] sm:$0xff] %vm50, %v48
    // Predicated region
    $region14: #{tpu_custom_call.1} parent=1 // pred_check
      _
    $region15: #{tpu_custom_call.1} parent=1 // pred_check_branch
      %53 = sbr.rel (0) target = $region17
    $region16: #{tpu_custom_call.1} parent=1 // pred_region
      %55 = vsyncadd [#allocation3], 0
      %s57 = sshll.u32 [#allocation2], 4
      %s58 = int_to_ptr.vmem [resolvable:$true] %s57
      %s59 = sshll.u32 %s3, 4
      %s60 = int_to_ptr.hbm [resolvable:$true] %s59
      %62 = dma.vmem_to_hbm [thread:$0]  %s58, 128, %s60, [#allocation3]
    $region17: #{tpu_custom_call.1} parent=1 // pred_fallthru
      _
    // Predicated region
    $region18: #{tpu_custom_call.1} parent=1 // pred_check
      _
    $region19: #{tpu_custom_call.1} parent=1 // pred_check_branch
      %64 = sbr.rel (0) target = $region21
    $region20: #{tpu_custom_call.1} parent=1 // pred_region
      %66 = dma.done [#allocation3], 128
    $region21: #{tpu_custom_call.1} parent=1 // pred_fallthru
      _
    %67 = vsyncpa [#allocation3], 1

</llo_original>
